<compile_context>
chip_gen: v7x
topology: tpu7x:2x2x1
jax: 0.10.0
libtpu: 0.0.40
codegen_flags: <defaults>
</compile_context>

<pallas_src>
import functools

import jax
import jax.numpy as jnp
from jax.experimental import pallas as pl
from jax.experimental.pallas import tpu as pltpu


def _round_up(x, m):
    return ((x + m - 1) // m) * m


def _elementwise_dtype():
    """bf16 for the O(TB*S*V) one-hot region on bf16-VALU chips (v6e/v7x),
    f32 otherwise (v5e and older have no bf16 VALU)."""
    try:
        kind = jax.devices()[0].device_kind.lower()
    except Exception:
        return jnp.float32
    if ("v6" in kind) or ("v7" in kind):
        return jnp.bfloat16
    return jnp.float32


def _vmem_budget_bytes():
    """Generation-aware scoped-VMEM budget (~75% of physical capacity)."""
    try:
        cap = int(pltpu.get_tpu_info().vmem_capacity_bytes)
    except Exception:
        cap = 64 * 1024 * 1024  # conservative (v7x-sized) fallback
    return max(16 * 1024 * 1024, (cap * 3) // 4)


def _classifier_kernel(ids_ref, mask_ref, wf_ref, b1_ref, w2_ref, b2_ref,
                       out_ref, *, ew_dtype):
    """One batch tile: in-kernel embedding gather + masked mean fused w/ Linear1.

    ids_ref  : (TB, S)   int32  token ids for this batch tile
    mask_ref : (TB, S)   f32    attention mask
    wf_ref   : (V, Hp)   bf16   fused (embedding @ Linear1.T), lane-padded H
    b1_ref   : (1, Hp)   f32
    w2_ref   : (Hp, Cp)  bf16   Linear2 weight, pre-transposed + lane-padded
    b2_ref   : (1, Cp)   f32
    out_ref  : (TB, Cp)  f32    logits (padded classes sliced off outside)
    """
    tb, s = ids_ref.shape
    v = wf_ref.shape[0]

    # Per-token weight = mask / S: `(x * mask[...,None]).mean(dim=1)` divides by
    # the full sequence length S, exactly like the PyTorch module.
    tok_w = (mask_ref[...] * (1.0 / s)).astype(ew_dtype)              # (TB, S)

    # Embedding gather + masked mean + Linear1 as one MXU contraction:
    #   counts[b, v] = sum_s tok_w[b, s] * [ids[b, s] == v]
    #   h[b, :]      = counts[b, :] @ W_fused + b1
    # Single fused select keeps only ~2 live (TB, S, V)-sized temporaries.
    vocab_iota = jax.lax.broadcasted_iota(jnp.int32, (1, 1, v), 2)
    ids = ids_ref[...]
    weighted = jnp.where(ids[:, :, None] == vocab_iota,
                         tok_w[:, :, None],
                         jnp.zeros((), ew_dtype))                     # (TB, S, V)
    counts = jnp.sum(weighted, axis=1)                                # (TB, V)

    # nn.Dropout(p) is identity in eval mode.  bf16 x bf16 -> f32 MXU path.
    h = jnp.dot(counts.astype(jnp.bfloat16), wf_ref[...],
                preferred_element_type=jnp.float32) + b1_ref[...]     # (TB, Hp)
    h = jnp.maximum(h, 0.0)                                           # ReLU
    logits = jnp.dot(h.astype(jnp.bfloat16), w2_ref[...],
                     preferred_element_type=jnp.float32) + b2_ref[...]
    out_ref[...] = logits                                             # (TB, Cp)


def prepare_params(params, param_dtype=jnp.bfloat16):
    """One-time conversion of PyTorch-convention params into kernel layout.

    Input: embedding (V, E); w1 (H, E), b1 (H,); w2 (C, H), b2 (C,).
    Output: Linear1 folded into the table (W_fused = emb @ w1.T), bf16 storage,
    hidden and head dims zero-padded to 128 lanes.
    """
    emb = jnp.asarray(params["embedding"], jnp.float32)                # (V, E)
    w1_t = jnp.asarray(params["w1"], jnp.float32).T                    # (E, H)
    b1 = jnp.asarray(params["b1"], jnp.float32)                        # (H,)
    w2_t = jnp.asarray(params["w2"], jnp.float32).T                    # (H, C)
    b2 = jnp.asarray(params["b2"], jnp.float32)                        # (C,)

    v = emb.shape[0]
    h = w1_t.shape[1]
    c = w2_t.shape[1]
    hp = max(128, _round_up(h, 128))
    cp = max(128, _round_up(c, 128))

    # Fold Linear1 into the table: valid because Dropout is identity in eval
    # mode and both the masked-mean pool and Linear1 are linear maps.
    wf = jnp.dot(emb, w1_t, precision=jax.lax.Precision.HIGHEST)       # (V, H)

    wf_p = jnp.zeros((v, hp), param_dtype).at[:, :h].set(wf.astype(param_dtype))
    b1_p = jnp.zeros((1, hp), jnp.float32).at[0, :h].set(b1)
    w2_p = jnp.zeros((hp, cp), param_dtype).at[:h, :c].set(w2_t.astype(param_dtype))
    b2_p = jnp.zeros((1, cp), jnp.float32).at[0, :c].set(b2)
    return {"wf": wf_p, "b1": b1_p, "w2": w2_p, "b2": b2_p}


@functools.partial(jax.jit, static_argnames=("num_classes", "batch_tile",
                                             "single_buffer_weights"))
def model_classifier_forward(input_ids, attention_mask, kparams, *,
                             num_classes, batch_tile=256,
                             single_buffer_weights=True):
    """Forward pass matching ModelClassifier.forward (eval mode)."""
    B, S = input_ids.shape
    wf, b1 = kparams["wf"], kparams["b1"]
    w2, b2 = kparams["w2"], kparams["b2"]
    V, Hp = wf.shape
    Cp = w2.shape[1]

    ew_dtype = _elementwise_dtype()            # trace-time constants
    ew_bytes = 2 if ew_dtype == jnp.bfloat16 else 4
    vmem_budget = _vmem_budget_bytes()

    # Batch tile: multiple of 8 sublanes, capped so ~2 live (TB, S, V) one-hot
    # temporaries + double-buffered ids/mask/out fit in half the scoped VMEM
    # budget (rest: single-buffered resident weights + compiler scratch).
    resident = (wf.size * wf.dtype.itemsize + w2.size * w2.dtype.itemsize
                + b1.size * 4 + b2.size * 4)
    bytes_per_row = 2 * S * V * ew_bytes + 2 * S * (4 + 4) + 2 * Cp * 4
    avail = max(vmem_budget // 2 - resident, 2 * 1024 * 1024)
    tb_cap = max(8, (avail // bytes_per_row // 8) * 8)

    b8 = _round_up(B, 8)
    tb = max(8, (min(batch_tile, b8, tb_cap) // 8) * 8)
    # Split into >=2 tiles when the batch allows, so the "parallel" batch axis
    # can actually shard across v7x's two TensorCores.
    if b8 >= 16 and tb >= b8:
        tb = max(8, (((b8 // 2) + 7) // 8) * 8)
    b_pad = _round_up(B, tb)

    ids = input_ids.astype(jnp.int32)
    mask = attention_mask.astype(jnp.float32)
    if b_pad != B:
        ids = jnp.pad(ids, ((0, b_pad - B), (0, 0)))
        mask = jnp.pad(mask, ((0, b_pad - B), (0, 0)))

    # Grid-invariant weights only need a single VMEM copy.
    wspec = {"pipeline_mode": pl.Buffered(1)} if single_buffer_weights else {}

    kernel = functools.partial(_classifier_kernel, ew_dtype=ew_dtype)
    out = pl.pallas_call(
        kernel,
        out_shape=jax.ShapeDtypeStruct((b_pad, Cp), jnp.float32),
        grid=(b_pad // tb,),
        in_specs=[
            pl.BlockSpec((tb, S), lambda i: (i, 0)),                 # ids  : per tile
            pl.BlockSpec((tb, S), lambda i: (i, 0)),                 # mask : per tile
            pl.BlockSpec((V, Hp), lambda i: (0, 0), **wspec),        # W_fused (resident)
            pl.BlockSpec((1, Hp), lambda i: (0, 0), **wspec),        # b1
            pl.BlockSpec((Hp, Cp), lambda i: (0, 0), **wspec),       # w2
            pl.BlockSpec((1, Cp), lambda i: (0, 0), **wspec),        # b2
        ],
        out_specs=pl.BlockSpec((tb, Cp), lambda i: (i, 0)),          # lane-dense logits
        compiler_params=pltpu.CompilerParams(
            dimension_semantics=("parallel",),                       # batch tiles across TCs
            vmem_limit_bytes=int(vmem_budget),
        ),
    )(ids, mask, wf, b1, w2, b2)

    return out[:B, :num_classes]


def _init_params(key, vocab_size, emb_dim, hidden, num_classes):
    """PyTorch-convention parameters: Linear weights are (out, in)."""
    k_emb, k_w1, k_b1, k_w2, k_b2 = jax.random.split(key, 5)
    return {
        "embedding": jax.random.normal(k_emb, (vocab_size, emb_dim), jnp.float32),
        "w1": jax.random.normal(k_w1, (hidden, emb_dim), jnp.float32) * 0.1,
        "b1": jax.random.normal(k_b1, (hidden,), jnp.float32) * 0.1,
        "w2": jax.random.normal(k_w2, (num_classes, hidden), jnp.float32) * 0.1,
        "b2": jax.random.normal(k_b2, (num_classes,), jnp.float32) * 0.1,
    }


def _reference_forward_f32(input_ids, attention_mask, params):
    """Pure-JAX f32 mirror of ModelClassifier.forward (eval mode)."""
    x = jnp.take(params["embedding"], input_ids, axis=0)              # (B, S, E)
    masked = x * attention_mask[:, :, None].astype(jnp.float32)
    pooled = masked.mean(axis=1)                                      # (B, E)
    h = pooled @ params["w1"].T + params["b1"]
    h = jnp.maximum(h, 0.0)
    return h @ params["w2"].T + params["b2"]


def _reference_forward_prepared(input_ids, attention_mask, kparams, num_classes):
    """Same math recomputed in f32 from the prepared (bf16-rounded, fused) params."""
    wf = kparams["wf"].astype(jnp.float32)
    w2 = kparams["w2"].astype(jnp.float32)[:, :num_classes]
    b1 = kparams["b1"][0]
    b2 = kparams["b2"][0, :num_classes]
    V = wf.shape[0]
    S = input_ids.shape[1]
    onehot = jax.nn.one_hot(input_ids, V, dtype=jnp.float32)          # (B, S, V)
    counts = jnp.sum(onehot * (attention_mask[:, :, None] / S), axis=1)
    h = jnp.maximum(counts @ wf + b1, 0.0)
    return h @ w2 + b2


if __name__ == "__main__":
    # Config consistent with the module's layer list:
    #   Embedding(vocab=128, dim=32) -> Dropout(0.3) -> Linear(32, 64)
    #   -> ReLU -> Linear(64, num_classes=4)
    B, S = 2, 8
    VOCAB, EMB, HIDDEN, NUM_CLASSES = 128, 32, 64, 4

    key = jax.random.PRNGKey(0)
    k_params, k_ids = jax.random.split(key, 2)

    params = _init_params(k_params, VOCAB, EMB, HIDDEN, NUM_CLASSES)
    kparams = prepare_params(params)  # one-time: fuse Linear1, bf16, lane-pad

    input_ids = jax.random.randint(k_ids, (B, S), 0, VOCAB, dtype=jnp.int32)
    # Deterministic mask: first row fully attended, second row half-padded.
    attention_mask = jnp.array(
        [[1.0] * S, [1.0] * (S // 2) + [0.0] * (S - S // 2)], dtype=jnp.float32)

    def run(single_buffer):
        out = model_classifier_forward(
            input_ids, attention_mask, kparams, num_classes=NUM_CLASSES,
            single_buffer_weights=single_buffer)
        return jax.block_until_ready(out)

    try:
        logits = run(True)
    except Exception:
        # Fallback if this Pallas build rejects pipeline_mode=pl.Buffered(1)
        # for the grid-invariant weight blocks.
        logits = run(False)

    assert logits.shape == (B, NUM_CLASSES)

    ref_prep = _reference_forward_prepared(input_ids, attention_mask, kparams,
                                           NUM_CLASSES)
    ref_f32 = _reference_forward_f32(input_ids, attention_mask, params)
    err_prep = float(jnp.max(jnp.abs(logits - ref_prep)))
    err_f32 = float(jnp.max(jnp.abs(logits - ref_f32)))
    assert jnp.allclose(logits, ref_prep, atol=1e-2, rtol=1e-2), err_prep
    assert jnp.allclose(logits, ref_f32, atol=5e-2, rtol=5e-2), err_f32

    print("KERNEL_OK")
</pallas_src>

<mosaic_0001>
module attributes {stable_mosaic.version = 11 : i64} {
  func.func @_classifier_kernel(%arg0: i32, %arg1: memref<8x8xi32, #tpu.memory_space<vmem>>, %arg2: memref<8x8xf32, #tpu.memory_space<vmem>>, %arg3: memref<128x128xbf16, #tpu.memory_space<vmem>>, %arg4: memref<1x128xf32, #tpu.memory_space<vmem>>, %arg5: memref<128x128xbf16, #tpu.memory_space<vmem>>, %arg6: memref<1x128xf32, #tpu.memory_space<vmem>>, %arg7: memref<8x128xf32, #tpu.memory_space<vmem>>) attributes {dimension_semantics = [#tpu.dimension_semantics<parallel>], iteration_bounds = array<i64: 1>, scalar_prefetch = 0 : i64, scratch_operands = 0 : i64, tpu.core_type = #tpu.core_type<tc>, window_params = [{transform_indices = @transform_0, window_bounds = array<i64: 8, 8>}, {transform_indices = @transform_1, window_bounds = array<i64: 8, 8>}, {pipeline_mode = #tpu.pipeline_mode<synchronous>, transform_indices = @transform_2, window_bounds = array<i64: 128, 128>}, {pipeline_mode = #tpu.pipeline_mode<synchronous>, transform_indices = @transform_3, window_bounds = array<i64: 1, 128>}, {pipeline_mode = #tpu.pipeline_mode<synchronous>, transform_indices = @transform_4, window_bounds = array<i64: 128, 128>}, {pipeline_mode = #tpu.pipeline_mode<synchronous>, transform_indices = @transform_5, window_bounds = array<i64: 1, 128>}, {transform_indices = @transform_6, window_bounds = array<i64: 8, 128>}]} {
    %c0 = arith.constant 0 : index
    %c0_0 = arith.constant 0 : index
    %0 = vector.load %arg2[%c0, %c0_0] : memref<8x8xf32, #tpu.memory_space<vmem>>, vector<8x8xf32>
    %cst = arith.constant 1.250000e-01 : f32
    %1 = vector.broadcast %cst : f32 to vector<8x8xf32>
    %2 = arith.mulf %0, %1 : vector<8x8xf32>
    %3 = tpu.iota {dimensions = array<i32: 2>} : vector<1x1x128xi32>
    %c0_1 = arith.constant 0 : index
    %c0_2 = arith.constant 0 : index
    %4 = vector.load %arg1[%c0_1, %c0_2] : memref<8x8xi32, #tpu.memory_space<vmem>>, vector<8x8xi32>
    %5 = vector.shape_cast %4 : vector<8x8xi32> to vector<8x8x1xi32>
    %6 = vector.broadcast %5 : vector<8x8x1xi32> to vector<8x8x128xi32>
    %7 = vector.broadcast %3 : vector<1x1x128xi32> to vector<8x8x128xi32>
    %8 = arith.cmpi eq, %6, %7 : vector<8x8x128xi32>
    %9 = vector.shape_cast %2 : vector<8x8xf32> to vector<8x8x1xf32>
    %cst_3 = arith.constant 0.000000e+00 : f32
    %10 = vector.shape_cast %9 : vector<8x8x1xf32> to vector<8x8x1xf32>
    %11 = vector.broadcast %10 : vector<8x8x1xf32> to vector<8x8x128xf32>
    %12 = vector.broadcast %cst_3 : f32 to vector<8x8x128xf32>
    %13 = arith.select %8, %11, %12 : vector<8x8x128xi1>, vector<8x8x128xf32>
    %cst_4 = arith.constant dense<0.000000e+00> : vector<8x128xf32>
    %14 = vector.multi_reduction <add>, %13, %cst_4 [1] : vector<8x8x128xf32> to vector<8x128xf32>
    %15 = arith.truncf %14 : vector<8x128xf32> to vector<8x128xbf16>
    %c0_5 = arith.constant 0 : index
    %c0_6 = arith.constant 0 : index
    %16 = vector.load %arg3[%c0_5, %c0_6] : memref<128x128xbf16, #tpu.memory_space<vmem>>, vector<128x128xbf16>
    %cst_7 = arith.constant dense<0.000000e+00> : vector<8x128xf32>
    %17 = tpu.matmul %15, %16, %cst_7 {dimension_numbers = #tpu.dot_dimension_numbers<[1], [0], [0], [1], [0, 0, 1, 1], [], []>} : vector<8x128xbf16>, vector<128x128xbf16>, vector<8x128xf32> -> vector<8x128xf32>
    %c0_8 = arith.constant 0 : index
    %c0_9 = arith.constant 0 : index
    %18 = vector.load %arg4[%c0_8, %c0_9] : memref<1x128xf32, #tpu.memory_space<vmem>>, vector<1x128xf32>
    %19 = vector.broadcast %18 : vector<1x128xf32> to vector<8x128xf32>
    %20 = arith.addf %17, %19 : vector<8x128xf32>
    %cst_10 = arith.constant 0.000000e+00 : f32
    %21 = vector.broadcast %cst_10 : f32 to vector<8x128xf32>
    %22 = arith.maximumf %20, %21 : vector<8x128xf32>
    %23 = arith.truncf %22 : vector<8x128xf32> to vector<8x128xbf16>
    %c0_11 = arith.constant 0 : index
    %c0_12 = arith.constant 0 : index
    %24 = vector.load %arg5[%c0_11, %c0_12] : memref<128x128xbf16, #tpu.memory_space<vmem>>, vector<128x128xbf16>
    %cst_13 = arith.constant dense<0.000000e+00> : vector<8x128xf32>
    %25 = tpu.matmul %23, %24, %cst_13 {dimension_numbers = #tpu.dot_dimension_numbers<[1], [0], [0], [1], [0, 0, 1, 1], [], []>} : vector<8x128xbf16>, vector<128x128xbf16>, vector<8x128xf32> -> vector<8x128xf32>
    %c0_14 = arith.constant 0 : index
    %c0_15 = arith.constant 0 : index
    %26 = vector.load %arg6[%c0_14, %c0_15] : memref<1x128xf32, #tpu.memory_space<vmem>>, vector<1x128xf32>
    %27 = vector.broadcast %26 : vector<1x128xf32> to vector<8x128xf32>
    %28 = arith.addf %25, %27 : vector<8x128xf32>
    %c0_16 = arith.constant 0 : index
    %c0_17 = arith.constant 0 : index
    %29 = vector.load %arg7[%c0_16, %c0_17] : memref<8x128xf32, #tpu.memory_space<vmem>>, vector<8x128xf32>
    tpu.vector_store %arg7[%c0_16, %c0_17], %28 {strides = array<i32>} : memref<8x128xf32, #tpu.memory_space<vmem>>, vector<8x128xf32>,
    return
  }
  func.func @transform_0(%arg0: i32) -> (i32, i32) {
    %c0_i32 = arith.constant 0 : i32
    %c0_i32_0 = arith.constant 0 : i32
    return %arg0, %c0_i32 : i32, i32
  }
  func.func @transform_1(%arg0: i32) -> (i32, i32) {
    %c0_i32 = arith.constant 0 : i32
    %c0_i32_0 = arith.constant 0 : i32
    return %arg0, %c0_i32 : i32, i32
  }
  func.func @transform_2(%arg0: i32) -> (i32, i32) {
    %c0_i32 = arith.constant 0 : i32
    %c0_i32_0 = arith.constant 0 : i32
    %c0_i32_1 = arith.constant 0 : i32
    return %c0_i32, %c0_i32_0 : i32, i32
  }
  func.func @transform_3(%arg0: i32) -> (i32, i32) {
    %c0_i32 = arith.constant 0 : i32
    %c0_i32_0 = arith.constant 0 : i32
    %c0_i32_1 = arith.constant 0 : i32
    return %c0_i32, %c0_i32_0 : i32, i32
  }
  func.func @transform_4(%arg0: i32) -> (i32, i32) {
    %c0_i32 = arith.constant 0 : i32
    %c0_i32_0 = arith.constant 0 : i32
    %c0_i32_1 = arith.constant 0 : i32
    return %c0_i32, %c0_i32_0 : i32, i32
  }
  func.func @transform_5(%arg0: i32) -> (i32, i32) {
    %c0_i32 = arith.constant 0 : i32
    %c0_i32_0 = arith.constant 0 : i32
    %c0_i32_1 = arith.constant 0 : i32
    return %c0_i32, %c0_i32_0 : i32, i32
  }
  func.func @transform_6(%arg0: i32) -> (i32, i32) {
    %c0_i32 = arith.constant 0 : i32
    %c0_i32_0 = arith.constant 0 : i32
    return %arg0, %c0_i32 : i32, i32
  }
}

module attributes {stable_mosaic.version = 11 : i64} {
  func.func @_classifier_kernel(%arg0: i32, %arg1: memref<8x8xi32, #tpu.memory_space<vmem>>, %arg2: memref<8x8xf32, #tpu.memory_space<vmem>>, %arg3: memref<128x128xbf16, #tpu.memory_space<vmem>>, %arg4: memref<1x128xf32, #tpu.memory_space<vmem>>, %arg5: memref<128x128xbf16, #tpu.memory_space<vmem>>, %arg6: memref<1x128xf32, #tpu.memory_space<vmem>>, %arg7: memref<8x128xf32, #tpu.memory_space<vmem>>) attributes {dimension_semantics = [#tpu.dimension_semantics<parallel>], iteration_bounds = array<i64: 1>, scalar_prefetch = 0 : i64, scratch_operands = 0 : i64, tpu.core_type = #tpu.core_type<tc>, window_params = [{transform_indices = @transform_0, window_bounds = array<i64: 8, 8>}, {transform_indices = @transform_1, window_bounds = array<i64: 8, 8>}, {pipeline_mode = #tpu.pipeline_mode<synchronous>, transform_indices = @transform_2, window_bounds = array<i64: 128, 128>}, {pipeline_mode = #tpu.pipeline_mode<synchronous>, transform_indices = @transform_3, window_bounds = array<i64: 1, 128>}, {pipeline_mode = #tpu.pipeline_mode<synchronous>, transform_indices = @transform_4, window_bounds = array<i64: 128, 128>}, {pipeline_mode = #tpu.pipeline_mode<synchronous>, transform_indices = @transform_5, window_bounds = array<i64: 1, 128>}, {transform_indices = @transform_6, window_bounds = array<i64: 8, 128>}]} {
    %c0 = arith.constant 0 : index
    %c0_0 = arith.constant 0 : index
    %0 = vector.load %arg2[%c0, %c0_0] : memref<8x8xf32, #tpu.memory_space<vmem>>, vector<8x8xf32>
    %cst = arith.constant 1.250000e-01 : f32
    %1 = vector.broadcast %cst : f32 to vector<8x8xf32>
    %2 = arith.mulf %0, %1 : vector<8x8xf32>
    %3 = tpu.iota {dimensions = array<i32: 2>} : vector<1x1x128xi32>
    %c0_1 = arith.constant 0 : index
    %c0_2 = arith.constant 0 : index
    %4 = vector.load %arg1[%c0_1, %c0_2] : memref<8x8xi32, #tpu.memory_space<vmem>>, vector<8x8xi32>
    %5 = vector.shape_cast %4 : vector<8x8xi32> to vector<8x8x1xi32>
    %6 = vector.broadcast %5 : vector<8x8x1xi32> to vector<8x8x128xi32>
    %7 = vector.broadcast %3 : vector<1x1x128xi32> to vector<8x8x128xi32>
    %8 = arith.cmpi eq, %6, %7 : vector<8x8x128xi32>
    %9 = vector.shape_cast %2 : vector<8x8xf32> to vector<8x8x1xf32>
    %cst_3 = arith.constant 0.000000e+00 : f32
    %10 = vector.shape_cast %9 : vector<8x8x1xf32> to vector<8x8x1xf32>
    %11 = vector.broadcast %10 : vector<8x8x1xf32> to vector<8x8x128xf32>
    %12 = vector.broadcast %cst_3 : f32 to vector<8x8x128xf32>
    %13 = arith.select %8, %11, %12 : vector<8x8x128xi1>, vector<8x8x128xf32>
    %cst_4 = arith.constant dense<0.000000e+00> : vector<8x128xf32>
    %14 = vector.multi_reduction <add>, %13, %cst_4 [1] : vector<8x8x128xf32> to vector<8x128xf32>
    %15 = arith.truncf %14 : vector<8x128xf32> to vector<8x128xbf16>
    %c0_5 = arith.constant 0 : index
    %c0_6 = arith.constant 0 : index
    %16 = vector.load %arg3[%c0_5, %c0_6] : memref<128x128xbf16, #tpu.memory_space<vmem>>, vector<128x128xbf16>
    %cst_7 = arith.constant dense<0.000000e+00> : vector<8x128xf32>
    %17 = tpu.matmul %15, %16, %cst_7 {dimension_numbers = #tpu.dot_dimension_numbers<[1], [0], [0], [1], [0, 0, 1, 1], [], []>} : vector<8x128xbf16>, vector<128x128xbf16>, vector<8x128xf32> -> vector<8x128xf32>
    %c0_8 = arith.constant 0 : index
    %c0_9 = arith.constant 0 : index
    %18 = vector.load %arg4[%c0_8, %c0_9] : memref<1x128xf32, #tpu.memory_space<vmem>>, vector<1x128xf32>
    %19 = vector.broadcast %18 : vector<1x128xf32> to vector<8x128xf32>
    %20 = arith.addf %17, %19 : vector<8x128xf32>
    %cst_10 = arith.constant 0.000000e+00 : f32
    %21 = vector.broadcast %cst_10 : f32 to vector<8x128xf32>
    %22 = arith.maximumf %20, %21 : vector<8x128xf32>
    %23 = arith.truncf %22 : vector<8x128xf32> to vector<8x128xbf16>
    %c0_11 = arith.constant 0 : index
    %c0_12 = arith.constant 0 : index
    %24 = vector.load %arg5[%c0_11, %c0_12] : memref<128x128xbf16, #tpu.memory_space<vmem>>, vector<128x128xbf16>
    %cst_13 = arith.constant dense<0.000000e+00> : vector<8x128xf32>
    %25 = tpu.matmul %23, %24, %cst_13 {dimension_numbers = #tpu.dot_dimension_numbers<[1], [0], [0], [1], [0, 0, 1, 1], [], []>} : vector<8x128xbf16>, vector<128x128xbf16>, vector<8x128xf32> -> vector<8x128xf32>
    %c0_14 = arith.constant 0 : index
    %c0_15 = arith.constant 0 : index
    %26 = vector.load %arg6[%c0_14, %c0_15] : memref<1x128xf32, #tpu.memory_space<vmem>>, vector<1x128xf32>
    %27 = vector.broadcast %26 : vector<1x128xf32> to vector<8x128xf32>
    %28 = arith.addf %25, %27 : vector<8x128xf32>
    %c0_16 = arith.constant 0 : index
    %c0_17 = arith.constant 0 : index
    %29 = vector.load %arg7[%c0_16, %c0_17] : memref<8x128xf32, #tpu.memory_space<vmem>>, vector<8x128xf32>
    tpu.vector_store %arg7[%c0_16, %c0_17], %28 {strides = array<i32>} : memref<8x128xf32, #tpu.memory_space<vmem>>, vector<8x128xf32>,
    return
  }
  func.func @transform_0(%arg0: i32) -> (i32, i32) {
    %c0_i32 = arith.constant 0 : i32
    %c0_i32_0 = arith.constant 0 : i32
    return %arg0, %c0_i32 : i32, i32
  }
  func.func @transform_1(%arg0: i32) -> (i32, i32) {
    %c0_i32 = arith.constant 0 : i32
    %c0_i32_0 = arith.constant 0 : i32
    return %arg0, %c0_i32 : i32, i32
  }
  func.func @transform_2(%arg0: i32) -> (i32, i32) {
    %c0_i32 = arith.constant 0 : i32
    %c0_i32_0 = arith.constant 0 : i32
    %c0_i32_1 = arith.constant 0 : i32
    return %c0_i32, %c0_i32_0 : i32, i32
  }
  func.func @transform_3(%arg0: i32) -> (i32, i32) {
    %c0_i32 = arith.constant 0 : i32
    %c0_i32_0 = arith.constant 0 : i32
    %c0_i32_1 = arith.constant 0 : i32
    return %c0_i32, %c0_i32_0 : i32, i32
  }
  func.func @transform_4(%arg0: i32) -> (i32, i32) {
    %c0_i32 = arith.constant 0 : i32
    %c0_i32_0 = arith.constant 0 : i32
    %c0_i32_1 = arith.constant 0 : i32
    return %c0_i32, %c0_i32_0 : i32, i32
  }
  func.func @transform_5(%arg0: i32) -> (i32, i32) {
    %c0_i32 = arith.constant 0 : i32
    %c0_i32_0 = arith.constant 0 : i32
    %c0_i32_1 = arith.constant 0 : i32
    return %c0_i32, %c0_i32_0 : i32, i32
  }
  func.func @transform_6(%arg0: i32) -> (i32, i32) {
    %c0_i32 = arith.constant 0 : i32
    %c0_i32_0 = arith.constant 0 : i32
    return %arg0, %c0_i32 : i32, i32
  }
}

</mosaic_0001>

<llo_original>
// kernel: model_classifier_forward.1
$region0: #{model_classifier_forward.1}
  #allocation0 [shape = 'u32[]', space=smem, size = 0x4, offset = 0x4, fixed_abs, tag = 'smem constant byte address 0x4 - core index']
  #allocation1 [shape = 'u32[144,128]{1,0:T(1,128)}', space=vmem, size = 0x12000, scoped, tag = 'internal scratch']
  %s0 = inlined_call_operand.vmem [shape: s32[8,8], index: 0, kind: input, shape index: {}]
  %s1 = inlined_call_operand.vmem [shape: f32[8,8], index: 1, kind: input, shape index: {}]
  %s2 = inlined_call_operand.hbm [shape: bf16[128,128], index: 2, kind: input, shape index: {}]
  %s3 = inlined_call_operand.vmem [shape: f32[1,128], index: 3, kind: input, shape index: {}]
  %s4 = inlined_call_operand.hbm [shape: bf16[128,128], index: 4, kind: input, shape index: {}]
  %s5 = inlined_call_operand.vmem [shape: f32[1,128], index: 5, kind: input, shape index: {}]
  %s6 = inlined_call_operand.vmem [shape: f32[8,128], index: 6, kind: output, shape index: {}]
  %s7 = sld [smem:[#allocation0]]
  $region42: #{model_classifier_forward.1} parent=0
    _
  %s9 = ssub.s32 1, %s7
  %s10 = scalar_select 0, %s9, %s7
  $region1: #{model_classifier_forward.1} parent=0
    #allocation2 [shape = 'u8[32768]{0}', space=vmem, size = 0x8000, scoped, tag = 'input window, operand 2, single buffered']
    #allocation3 [shape = 's32[1]{0}', space=sflag, size = 0x4, scoped, tag = 'scoped memory for model_classifier_forward.1']
    #allocation4 [shape = 'u8[32768]{0}', space=vmem, size = 0x8000, scoped, tag = 'input window, operand 4, single buffered']
    #allocation5 [shape = 's32[1]{0}', space=sflag, size = 0x4, scoped, tag = 'scoped memory for model_classifier_forward.1']
    %11 = vsyncpa [#allocation3], 0
    %12 = vsyncpa [#allocation5], 0
    // Predicated region
    $region2: #{model_classifier_forward.1} parent=1 // pred_check
      _
    $region3: #{model_classifier_forward.1} parent=1 // pred_check_branch
      %14 = sbr.rel (0) target = $region5
    $region4: #{model_classifier_forward.1} parent=1 // pred_region
      _
    $region5: #{model_classifier_forward.1} parent=1 // pred_fallthru
      _
    // Predicated region
    $region6: #{model_classifier_forward.1} parent=1 // pred_check
      _
    $region7: #{model_classifier_forward.1} parent=1 // pred_check_branch
      %16 = sbr.rel (0) target = $region9
    $region8: #{model_classifier_forward.1} parent=1 // pred_region
      _
    $region9: #{model_classifier_forward.1} parent=1 // pred_fallthru
      _
    // Predicated region
    $region10: #{model_classifier_forward.1} parent=1 // pred_check
      _
    $region11: #{model_classifier_forward.1} parent=1 // pred_check_branch
      %18 = sbr.rel (0) target = $region13
    $region12: #{model_classifier_forward.1} parent=1 // pred_region
      %s20 = ssub.s32 1024, 1024
      %21 = vsyncadd [#allocation3], %s20
      %s22 = sshll.u32 [#allocation2], 4
      %s23 = int_to_ptr.vmem [resolvable:$true] %s22
      %28 = dma.hbm_to_vmem [thread:$0]  %s2, 1024, %s23, [#allocation3], 64, 64, 4
    $region13: #{model_classifier_forward.1} parent=1 // pred_fallthru
      _
    // Predicated region
    $region14: #{model_classifier_forward.1} parent=1 // pred_check
      _
    $region15: #{model_classifier_forward.1} parent=1 // pred_check_branch
      %30 = sbr.rel (0) target = $region17
    $region16: #{model_classifier_forward.1} parent=1 // pred_region
      _
    $region17: #{model_classifier_forward.1} parent=1 // pred_fallthru
      _
    // Predicated region
    $region18: #{model_classifier_forward.1} parent=1 // pred_check
      _
    $region19: #{model_classifier_forward.1} parent=1 // pred_check_branch
      %32 = sbr.rel (0) target = $region21
    $region20: #{model_classifier_forward.1} parent=1 // pred_region
      %s34 = ssub.s32 1024, 1024
      %35 = vsyncadd [#allocation5], %s34
      %s36 = sshll.u32 [#allocation4], 4
      %s37 = int_to_ptr.vmem [resolvable:$true] %s36
      %42 = dma.hbm_to_vmem [thread:$0]  %s4, 1024, %s37, [#allocation5], 64, 64, 4
    $region21: #{model_classifier_forward.1} parent=1 // pred_fallthru
      _
    // Predicated region
    $region22: #{model_classifier_forward.1} parent=1 // pred_check
      _
    $region23: #{model_classifier_forward.1} parent=1 // pred_check_branch
      %44 = sbr.rel (0) target = $region25
    $region24: #{model_classifier_forward.1} parent=1 // pred_region
      _
    $region25: #{model_classifier_forward.1} parent=1 // pred_fallthru
      _
    // Predicated region
    $region26: #{model_classifier_forward.1} parent=1 // pred_check
      _
    $region27: #{model_classifier_forward.1} parent=1 // pred_check_branch
      %46 = sbr.rel (0) target = $region29
    $region28: #{model_classifier_forward.1} parent=1 // pred_region
      %47 = dma.done [#allocation3], 1024
    $region29: #{model_classifier_forward.1} parent=1 // pred_fallthru
      _
    // Predicated region
    $region30: #{model_classifier_forward.1} parent=1 // pred_check
      _
    $region31: #{model_classifier_forward.1} parent=1 // pred_check_branch
      %49 = sbr.rel (0) target = $region33
    $region32: #{model_classifier_forward.1} parent=1 // pred_region
      %50 = dma.done [#allocation5], 1024
    $region33: #{model_classifier_forward.1} parent=1 // pred_fallthru
      _
    %v52 = vld [vmem:[%s1] sm:$0xff]
    %v53 = vmul.f32 %v52, 0.125
    %v54 = vlaneseq
    %v55 = vand.u32 %v54, 127
    %v56 = vld [vmem:[%s0] sm:$0xff]
    %v57 = vlaneseq
    %v58 = vshrl.u32 %v57, 7
    %v59 = vsub.s32 0, %v58
    %v60 = vrot.slane %v56, %v59
    %62 = vbcast.lane.b32.xlu0 %v60, 256
    %v63 = vpop.permute.xlu0 %62
    %v64 = vlaneseq
    %v65 = vshrl.u32 %v64, 7
    %v66 = vsub.s32 1, %v65
    %v67 = vrot.slane %v56, %v66
    %69 = vbcast.lane.b32.xlu0 %v67, 256
    %v70 = vpop.permute.xlu0 %69
    %v71 = vlaneseq
    %v72 = vshrl.u32 %v71, 7
    %v73 = vsub.s32 2, %v72
    %v74 = vrot.slane %v56, %v73
    %76 = vbcast.lane.b32.xlu0 %v74, 256
    %v77 = vpop.permute.xlu0 %76
    %v78 = vlaneseq
    %v79 = vshrl.u32 %v78, 7
    %v80 = vsub.s32 3, %v79
    %v81 = vrot.slane %v56, %v80
    %83 = vbcast.lane.b32.xlu0 %v81, 256
    %v84 = vpop.permute.xlu0 %83
    %v85 = vlaneseq
    %v86 = vshrl.u32 %v85, 7
    %v87 = vsub.s32 4, %v86
    %v88 = vrot.slane %v56, %v87
    %90 = vbcast.lane.b32.xlu0 %v88, 256
    %v91 = vpop.permute.xlu0 %90
    %v92 = vlaneseq
    %v93 = vshrl.u32 %v92, 7
    %v94 = vsub.s32 5, %v93
    %v95 = vrot.slane %v56, %v94
    %97 = vbcast.lane.b32.xlu0 %v95, 256
    %v98 = vpop.permute.xlu0 %97
    %v99 = vlaneseq
    %v100 = vshrl.u32 %v99, 7
    %v101 = vsub.s32 6, %v100
    %v102 = vrot.slane %v56, %v101
    %104 = vbcast.lane.b32.xlu0 %v102, 256
    %v105 = vpop.permute.xlu0 %104
    %v106 = vlaneseq
    %v107 = vshrl.u32 %v106, 7
    %v108 = vsub.s32 7, %v107
    %v109 = vrot.slane %v56, %v108
    %111 = vbcast.lane.b32.xlu0 %v109, 256
    %v112 = vpop.permute.xlu0 %111
    %vm113 = vcmp.eq.s32.totalorder %v63, %v55
    %vm114 = vcmp.eq.s32.totalorder %v70, %v55
    %vm115 = vcmp.eq.s32.totalorder %v77, %v55
    %vm116 = vcmp.eq.s32.totalorder %v84, %v55
    %vm117 = vcmp.eq.s32.totalorder %v91, %v55
    %vm118 = vcmp.eq.s32.totalorder %v98, %v55
    %vm119 = vcmp.eq.s32.totalorder %v105, %v55
    %vm120 = vcmp.eq.s32.totalorder %v112, %v55
    %v121 = vlaneseq
    %v122 = vshrl.u32 %v121, 7
    %v123 = vsub.s32 0, %v122
    %v124 = vrot.slane %v53, %v123
    %126 = vbcast.lane.b32.xlu0 %v124, 256
    %v127 = vpop.permute.xlu0 %126
    %v128 = vlaneseq
    %v129 = vshrl.u32 %v128, 7
    %v130 = vsub.s32 1, %v129
    %v131 = vrot.slane %v53, %v130
    %133 = vbcast.lane.b32.xlu0 %v131, 256
    %v134 = vpop.permute.xlu0 %133
    %v135 = vlaneseq
    %v136 = vshrl.u32 %v135, 7
    %v137 = vsub.s32 2, %v136
    %v138 = vrot.slane %v53, %v137
    %140 = vbcast.lane.b32.xlu0 %v138, 256
    %v141 = vpop.permute.xlu0 %140
    %v142 = vlaneseq
    %v143 = vshrl.u32 %v142, 7
    %v144 = vsub.s32 3, %v143
    %v145 = vrot.slane %v53, %v144
    %147 = vbcast.lane.b32.xlu0 %v145, 256
    %v148 = vpop.permute.xlu0 %147
    %v149 = vlaneseq
    %v150 = vshrl.u32 %v149, 7
    %v151 = vsub.s32 4, %v150
    %v152 = vrot.slane %v53, %v151
    %154 = vbcast.lane.b32.xlu0 %v152, 256
    %v155 = vpop.permute.xlu0 %154
    %v156 = vlaneseq
    %v157 = vshrl.u32 %v156, 7
    %v158 = vsub.s32 5, %v157
    %v159 = vrot.slane %v53, %v158
    %161 = vbcast.lane.b32.xlu0 %v159, 256
    %v162 = vpop.permute.xlu0 %161
    %v163 = vlaneseq
    %v164 = vshrl.u32 %v163, 7
    %v165 = vsub.s32 6, %v164
    %v166 = vrot.slane %v53, %v165
    %168 = vbcast.lane.b32.xlu0 %v166, 256
    %v169 = vpop.permute.xlu0 %168
    %v170 = vlaneseq
    %v171 = vshrl.u32 %v170, 7
    %v172 = vsub.s32 7, %v171
    %v173 = vrot.slane %v53, %v172
    %175 = vbcast.lane.b32.xlu0 %v173, 256
    %v176 = vpop.permute.xlu0 %175
    %v177 = vsel %vm113, %v127, 0.0
    %v178 = vsel %vm114, %v134, 0.0
    %v179 = vsel %vm115, %v141, 0.0
    %v180 = vsel %vm116, %v148, 0.0
    %v181 = vsel %vm117, %v155, 0.0
    %v182 = vsel %vm118, %v162, 0.0
    %v183 = vsel %vm119, %v169, 0.0
    %v184 = vsel %vm120, %v176, 0.0
    %v185 = vrot.slane %v177, 4
    %v186 = vadd.f32 %v177, %v185
    %v187 = vrot.slane %v186, 2
    %v188 = vadd.f32 %v186, %v187
    %v189 = vrot.slane %v188, 1
    %v190 = vadd.f32 %v188, %v189
    %v191 = vrot.slane %v178, 4
    %v192 = vadd.f32 %v178, %v191
    %v193 = vrot.slane %v192, 2
    %v194 = vadd.f32 %v192, %v193
    %v195 = vrot.slane %v194, 1
    %v196 = vadd.f32 %v194, %v195
    %v197 = vrot.slane %v179, 4
    %v198 = vadd.f32 %v179, %v197
    %v199 = vrot.slane %v198, 2
    %v200 = vadd.f32 %v198, %v199
    %v201 = vrot.slane %v200, 1
    %v202 = vadd.f32 %v200, %v201
    %v203 = vrot.slane %v180, 4
    %v204 = vadd.f32 %v180, %v203
    %v205 = vrot.slane %v204, 2
    %v206 = vadd.f32 %v204, %v205
    %v207 = vrot.slane %v206, 1
    %v208 = vadd.f32 %v206, %v207
    %v209 = vrot.slane %v181, 4
    %v210 = vadd.f32 %v181, %v209
    %v211 = vrot.slane %v210, 2
    %v212 = vadd.f32 %v210, %v211
    %v213 = vrot.slane %v212, 1
    %v214 = vadd.f32 %v212, %v213
    %v215 = vrot.slane %v182, 4
    %v216 = vadd.f32 %v182, %v215
    %v217 = vrot.slane %v216, 2
    %v218 = vadd.f32 %v216, %v217
    %v219 = vrot.slane %v218, 1
    %v220 = vadd.f32 %v218, %v219
    %v221 = vrot.slane %v183, 4
    %v222 = vadd.f32 %v183, %v221
    %v223 = vrot.slane %v222, 2
    %v224 = vadd.f32 %v222, %v223
    %v225 = vrot.slane %v224, 1
    %v226 = vadd.f32 %v224, %v225
    %v227 = vrot.slane %v184, 4
    %v228 = vadd.f32 %v184, %v227
    %v229 = vrot.slane %v228, 2
    %v230 = vadd.f32 %v228, %v229
    %v231 = vrot.slane %v230, 1
    %v232 = vadd.f32 %v230, %v231
    %v233 = vpack.c.bf16 %v190, %v190
    %v234 = vpack.c.bf16 %v196, %v196
    %v235 = vpack.c.bf16 %v202, %v202
    %v236 = vpack.c.bf16 %v208, %v208
    %v237 = vpack.c.bf16 %v214, %v214
    %v238 = vpack.c.bf16 %v220, %v220
    %v239 = vpack.c.bf16 %v226, %v226
    %v240 = vpack.c.bf16 %v232, %v232
    %v241 = vld [vmem:[#allocation2] sm:$0xf]
    %v242 = vld [vmem:[#allocation2 + $0x4] sm:$0xf]
    %v243 = vld [vmem:[#allocation2 + $0x8] sm:$0xf]
    %v244 = vld [vmem:[#allocation2 + $0xc] sm:$0xf]
    %v245 = vld [vmem:[#allocation2 + $0x10] sm:$0xf]
    %v246 = vld [vmem:[#allocation2 + $0x14] sm:$0xf]
    %v247 = vld [vmem:[#allocation2 + $0x18] sm:$0xf]
    %v248 = vld [vmem:[#allocation2 + $0x1c] sm:$0xf]
    %v249 = vld [vmem:[#allocation2 + $0x20] sm:$0xf]
    %v250 = vld [vmem:[#allocation2 + $0x24] sm:$0xf]
    %v251 = vld [vmem:[#allocation2 + $0x28] sm:$0xf]
    %v252 = vld [vmem:[#allocation2 + $0x2c] sm:$0xf]
    %v253 = vld [vmem:[#allocation2 + $0x30] sm:$0xf]
    %v254 = vld [vmem:[#allocation2 + $0x34] sm:$0xf]
    %v255 = vld [vmem:[#allocation2 + $0x38] sm:$0xf]
    %v256 = vld [vmem:[#allocation2 + $0x3c] sm:$0xf]
    %v257 = vld [vmem:[%s3] sm:$0x1]
    %v259 = vlaneseq
    %v260 = vshrl.u32 %v259, 7
    %v261 = vsub.s32 0, %v260
    %v262 = vrot.slane %v257, %v261
    %v272 = vunpack.c.l.b16 %v233
    %v273 = vunpack.c.l.b16 %v234
    %v274 = vunpack.c.l.b16 %v235
    %v275 = vunpack.c.l.b16 %v236
    %v276 = vunpack.c.l.b16 %v237
    %v277 = vunpack.c.l.b16 %v238
    %v278 = vunpack.c.l.b16 %v239
    %v279 = vunpack.c.l.b16 %v240
    %vm280 = vcmask 1041409
    %v281 = vsel %vm280, %v273, %v272
    %vm282 = vcmask 1042434
    %v283 = vsel %vm282, %v274, %v281
    %vm284 = vcmask 1043459
    %v285 = vsel %vm284, %v275, %v283
    %vm286 = vcmask 1044484
    %v287 = vsel %vm286, %v276, %v285
    %vm288 = vcmask 1045509
    %v289 = vsel %vm288, %v277, %v287
    %vm290 = vcmask 1046534
    %v291 = vsel %vm290, %v278, %v289
    %vm292 = vcmask 1047559
    %v293 = vsel %vm292, %v279, %v291
    %v294 = vpack.c.b16 %v293, %v293
    %v312 = vunpack.c.l.b16 %v241
    %v313 = vunpack.c.l.b16 %v242
    %v314 = vunpack.c.l.b16 %v243
    %v315 = vunpack.c.l.b16 %v244
    %v316 = vunpack.c.l.b16 %v245
    %v317 = vunpack.c.l.b16 %v246
    %v318 = vunpack.c.l.b16 %v247
    %v319 = vunpack.c.l.b16 %v248
    %v320 = vunpack.c.l.b16 %v249
    %v321 = vunpack.c.l.b16 %v250
    %v322 = vunpack.c.l.b16 %v251
    %v323 = vunpack.c.l.b16 %v252
    %v324 = vunpack.c.l.b16 %v253
    %v325 = vunpack.c.l.b16 %v254
    %v326 = vunpack.c.l.b16 %v255
    %v327 = vunpack.c.l.b16 %v256
    %v328 = vpack.c.b16 %v313, %v312
    %v329 = vpack.c.b16 %v315, %v314
    %v330 = vpack.c.b16 %v317, %v316
    %v331 = vpack.c.b16 %v319, %v318
    %v332 = vpack.c.b16 %v321, %v320
    %v333 = vpack.c.b16 %v323, %v322
    %v334 = vpack.c.b16 %v325, %v324
    %v335 = vpack.c.b16 %v327, %v326
    %344 = vmatprep.subr.bf16.mxu0 0
    %345 = vmatpush1.bf16.msra.mxu0 %v328
    %346 = vmatprep.subr.bf16.mxu0 0
    %347 = vmatpush1.bf16.msra.mxu0 %v329
    %348 = vmatprep.subr.bf16.mxu0 0
    %349 = vmatpush1.bf16.msra.mxu0 %v330
    %350 = vmatprep.subr.bf16.mxu0 0
    %351 = vmatpush1.bf16.msra.mxu0 %v331
    %352 = vmatprep.subr.bf16.mxu0 0
    %353 = vmatpush1.bf16.msra.mxu0 %v332
    %354 = vmatprep.subr.bf16.mxu0 0
    %355 = vmatpush1.bf16.msra.mxu0 %v333
    %356 = vmatprep.subr.bf16.mxu0 0
    %357 = vmatpush1.bf16.msra.mxu0 %v334
    %358 = vmatprep.subr.bf16.mxu0 0
    %359 = vmatpush1.bf16.msra.mxu0 %v335
    %360 = vmatprep.subr.bf16.mxu0 0
    %361 = vmatpush1.bf16.msra.mxu0 0
    %362 = vmatprep.subr.bf16.mxu0 0
    %363 = vmatpush1.bf16.msra.mxu0 0
    %364 = vmatprep.subr.bf16.mxu0 0
    %365 = vmatpush1.bf16.msra.mxu0 0
    %366 = vmatprep.subr.bf16.mxu0 0
    %367 = vmatpush1.bf16.msra.mxu0 0
    %368 = vmatprep.subr.bf16.mxu0 0
    %369 = vmatpush1.bf16.msra.mxu0 0
    %370 = vmatprep.subr.bf16.mxu0 0
    %371 = vmatpush1.bf16.msra.mxu0 0
    %372 = vmatprep.subr.bf16.mxu0 0
    %373 = vmatpush1.bf16.msra.mxu0 0
    %374 = vmatprep.subr.bf16.mxu0 0
    %375 = vmatpush1.bf16.msra.mxu0 0
    %376 = vmatprep.mubr.bf16.mxu0 0
    %377 = vmatmul.mubr.bf16.gmra.mrb[0].mxu0 %v294
    %v378 = vpop.f32.mrb[0].mxu0
    %v379 = vadd.f32 %v262, %v378
    %v380 = vpop.f32.mrb[0].mxu0
    %v381 = vpop.f32.mrb[0].mxu0
    %v382 = vpop.f32.mrb[0].mxu0
    %383 = vdwg.mxu0
    %v384 = vmax.f32 %v379, 0.0
    %v385 = vpack.c.bf16 %v384, %v384
    %v386 = vld [vmem:[#allocation4] sm:$0xf]
    %v387 = vld [vmem:[#allocation4 + $0x4] sm:$0xf]
    %v388 = vld [vmem:[#allocation4 + $0x8] sm:$0xf]
    %v389 = vld [vmem:[#allocation4 + $0xc] sm:$0xf]
    %v390 = vld [vmem:[#allocation4 + $0x10] sm:$0xf]
    %v391 = vld [vmem:[#allocation4 + $0x14] sm:$0xf]
    %v392 = vld [vmem:[#allocation4 + $0x18] sm:$0xf]
    %v393 = vld [vmem:[#allocation4 + $0x1c] sm:$0xf]
    %v394 = vld [vmem:[#allocation4 + $0x20] sm:$0xf]
    %v395 = vld [vmem:[#allocation4 + $0x24] sm:$0xf]
    %v396 = vld [vmem:[#allocation4 + $0x28] sm:$0xf]
    %v397 = vld [vmem:[#allocation4 + $0x2c] sm:$0xf]
    %v398 = vld [vmem:[#allocation4 + $0x30] sm:$0xf]
    %v399 = vld [vmem:[#allocation4 + $0x34] sm:$0xf]
    %v400 = vld [vmem:[#allocation4 + $0x38] sm:$0xf]
    %v401 = vld [vmem:[#allocation4 + $0x3c] sm:$0xf]
    %v402 = vld [vmem:[%s5] sm:$0x1]
    %v404 = vlaneseq
    %v405 = vshrl.u32 %v404, 7
    %v406 = vsub.s32 0, %v405
    %v407 = vrot.slane %v402, %v406
    %v425 = vunpack.c.l.b16 %v386
    %v426 = vunpack.c.l.b16 %v387
    %v427 = vunpack.c.l.b16 %v388
    %v428 = vunpack.c.l.b16 %v389
    %v429 = vunpack.c.l.b16 %v390
    %v430 = vunpack.c.l.b16 %v391
    %v431 = vunpack.c.l.b16 %v392
    %v432 = vunpack.c.l.b16 %v393
    %v433 = vunpack.c.l.b16 %v394
    %v434 = vunpack.c.l.b16 %v395
    %v435 = vunpack.c.l.b16 %v396
    %v436 = vunpack.c.l.b16 %v397
    %v437 = vunpack.c.l.b16 %v398
    %v438 = vunpack.c.l.b16 %v399
    %v439 = vunpack.c.l.b16 %v400
    %v440 = vunpack.c.l.b16 %v401
    %v441 = vpack.c.b16 %v426, %v425
    %v442 = vpack.c.b16 %v428, %v427
    %v443 = vpack.c.b16 %v430, %v429
    %v444 = vpack.c.b16 %v432, %v431
    %v445 = vpack.c.b16 %v434, %v433
    %v446 = vpack.c.b16 %v436, %v435
    %v447 = vpack.c.b16 %v438, %v437
    %v448 = vpack.c.b16 %v440, %v439
    %457 = vmatprep.subr.bf16.mxu0 0
    %458 = vmatpush1.bf16.msra.mxu0 %v441
    %459 = vmatprep.subr.bf16.mxu0 0
    %460 = vmatpush1.bf16.msra.mxu0 %v442
    %461 = vmatprep.subr.bf16.mxu0 0
    %462 = vmatpush1.bf16.msra.mxu0 %v443
    %463 = vmatprep.subr.bf16.mxu0 0
    %464 = vmatpush1.bf16.msra.mxu0 %v444
    %465 = vmatprep.subr.bf16.mxu0 0
    %466 = vmatpush1.bf16.msra.mxu0 %v445
    %467 = vmatprep.subr.bf16.mxu0 0
    %468 = vmatpush1.bf16.msra.mxu0 %v446
    %469 = vmatprep.subr.bf16.mxu0 0
    %470 = vmatpush1.bf16.msra.mxu0 %v447
    %471 = vmatprep.subr.bf16.mxu0 0
    %472 = vmatpush1.bf16.msra.mxu0 %v448
    %473 = vmatprep.subr.bf16.mxu0 0
    %474 = vmatpush1.bf16.msra.mxu0 0
    %475 = vmatprep.subr.bf16.mxu0 0
    %476 = vmatpush1.bf16.msra.mxu0 0
    %477 = vmatprep.subr.bf16.mxu0 0
    %478 = vmatpush1.bf16.msra.mxu0 0
    %479 = vmatprep.subr.bf16.mxu0 0
    %480 = vmatpush1.bf16.msra.mxu0 0
    %481 = vmatprep.subr.bf16.mxu0 0
    %482 = vmatpush1.bf16.msra.mxu0 0
    %483 = vmatprep.subr.bf16.mxu0 0
    %484 = vmatpush1.bf16.msra.mxu0 0
    %485 = vmatprep.subr.bf16.mxu0 0
    %486 = vmatpush1.bf16.msra.mxu0 0
    %487 = vmatprep.subr.bf16.mxu0 0
    %488 = vmatpush1.bf16.msra.mxu0 0
    %489 = vmatprep.mubr.bf16.mxu0 0
    %490 = vmatmul.mubr.bf16.gmra.mrb[0].mxu0 %v385
    %v491 = vpop.f32.mrb[0].mxu0
    %v492 = vadd.f32 %v407, %v491
    %v493 = vpop.f32.mrb[0].mxu0
    %v494 = vpop.f32.mrb[0].mxu0
    %v495 = vpop.f32.mrb[0].mxu0
    %496 = vdwg.mxu0
    %497 = vst [vmem:[%s6] sm:$0xff] %v492
    // Predicated region
    $region34: #{model_classifier_forward.1} parent=1 // pred_check
      _
    $region35: #{model_classifier_forward.1} parent=1 // pred_check_branch
      %499 = sbr.rel (0) target = $region37
    $region36: #{model_classifier_forward.1} parent=1 // pred_region
      _
    $region37: #{model_classifier_forward.1} parent=1 // pred_fallthru
      _
    // Predicated region
    $region38: #{model_classifier_forward.1} parent=1 // pred_check
      _
    $region39: #{model_classifier_forward.1} parent=1 // pred_check_branch
      %501 = sbr.rel (0) target = $region41
    $region40: #{model_classifier_forward.1} parent=1 // pred_region
      _
    $region41: #{model_classifier_forward.1} parent=1 // pred_fallthru
      _
    %502 = vsyncpa [#allocation3], 1
    %503 = vsyncpa [#allocation5], 1

// kernel: model_classifier_forward.1
$region0: #{model_classifier_forward.1}
  #allocation0 [shape = 'u32[]', space=smem, size = 0x4, offset = 0x4, fixed_abs, tag = 'smem constant byte address 0x4 - core index']
  #allocation1 [shape = 'u32[144,128]{1,0:T(1,128)}', space=vmem, size = 0x12000, scoped, tag = 'internal scratch']
  %s0 = inlined_call_operand.vmem [shape: s32[8,8], index: 0, kind: input, shape index: {}]
  %s1 = inlined_call_operand.vmem [shape: f32[8,8], index: 1, kind: input, shape index: {}]
  %s2 = inlined_call_operand.hbm [shape: bf16[128,128], index: 2, kind: input, shape index: {}]
  %s3 = inlined_call_operand.vmem [shape: f32[1,128], index: 3, kind: input, shape index: {}]
  %s4 = inlined_call_operand.hbm [shape: bf16[128,128], index: 4, kind: input, shape index: {}]
  %s5 = inlined_call_operand.vmem [shape: f32[1,128], index: 5, kind: input, shape index: {}]
  %s6 = inlined_call_operand.vmem [shape: f32[8,128], index: 6, kind: output, shape index: {}]
  %s7 = sld [smem:[#allocation0]]
  $region42: #{model_classifier_forward.1} parent=0
    _
  %s9 = ssub.s32 1, %s7
  %s10 = scalar_select 0, %s9, %s7
  $region1: #{model_classifier_forward.1} parent=0
    #allocation2 [shape = 'u8[32768]{0}', space=vmem, size = 0x8000, scoped, tag = 'input window, operand 2, single buffered']
    #allocation3 [shape = 's32[1]{0}', space=sflag, size = 0x4, scoped, tag = 'scoped memory for model_classifier_forward.1']
    #allocation4 [shape = 'u8[32768]{0}', space=vmem, size = 0x8000, scoped, tag = 'input window, operand 4, single buffered']
    #allocation5 [shape = 's32[1]{0}', space=sflag, size = 0x4, scoped, tag = 'scoped memory for model_classifier_forward.1']
    %11 = vsyncpa [#allocation3], 0
    %12 = vsyncpa [#allocation5], 0
    // Predicated region
    $region2: #{model_classifier_forward.1} parent=1 // pred_check
      _
    $region3: #{model_classifier_forward.1} parent=1 // pred_check_branch
      %14 = sbr.rel (0) target = $region5
    $region4: #{model_classifier_forward.1} parent=1 // pred_region
      _
    $region5: #{model_classifier_forward.1} parent=1 // pred_fallthru
      _
    // Predicated region
    $region6: #{model_classifier_forward.1} parent=1 // pred_check
      _
    $region7: #{model_classifier_forward.1} parent=1 // pred_check_branch
      %16 = sbr.rel (0) target = $region9
    $region8: #{model_classifier_forward.1} parent=1 // pred_region
      _
    $region9: #{model_classifier_forward.1} parent=1 // pred_fallthru
      _
    // Predicated region
    $region10: #{model_classifier_forward.1} parent=1 // pred_check
      _
    $region11: #{model_classifier_forward.1} parent=1 // pred_check_branch
      %18 = sbr.rel (0) target = $region13
    $region12: #{model_classifier_forward.1} parent=1 // pred_region
      %s20 = ssub.s32 1024, 1024
      %21 = vsyncadd [#allocation3], %s20
      %s22 = sshll.u32 [#allocation2], 4
      %s23 = int_to_ptr.vmem [resolvable:$true] %s22
      %28 = dma.hbm_to_vmem [thread:$0]  %s2, 1024, %s23, [#allocation3], 64, 64, 4
    $region13: #{model_classifier_forward.1} parent=1 // pred_fallthru
      _
    // Predicated region
    $region14: #{model_classifier_forward.1} parent=1 // pred_check
      _
    $region15: #{model_classifier_forward.1} parent=1 // pred_check_branch
      %30 = sbr.rel (0) target = $region17
    $region16: #{model_classifier_forward.1} parent=1 // pred_region
      _
    $region17: #{model_classifier_forward.1} parent=1 // pred_fallthru
      _
    // Predicated region
    $region18: #{model_classifier_forward.1} parent=1 // pred_check
      _
    $region19: #{model_classifier_forward.1} parent=1 // pred_check_branch
      %32 = sbr.rel (0) target = $region21
    $region20: #{model_classifier_forward.1} parent=1 // pred_region
      %s34 = ssub.s32 1024, 1024
      %35 = vsyncadd [#allocation5], %s34
      %s36 = sshll.u32 [#allocation4], 4
      %s37 = int_to_ptr.vmem [resolvable:$true] %s36
      %42 = dma.hbm_to_vmem [thread:$0]  %s4, 1024, %s37, [#allocation5], 64, 64, 4
    $region21: #{model_classifier_forward.1} parent=1 // pred_fallthru
      _
    // Predicated region
    $region22: #{model_classifier_forward.1} parent=1 // pred_check
      _
    $region23: #{model_classifier_forward.1} parent=1 // pred_check_branch
      %44 = sbr.rel (0) target = $region25
    $region24: #{model_classifier_forward.1} parent=1 // pred_region
      _
    $region25: #{model_classifier_forward.1} parent=1 // pred_fallthru
      _
    // Predicated region
    $region26: #{model_classifier_forward.1} parent=1 // pred_check
      _
    $region27: #{model_classifier_forward.1} parent=1 // pred_check_branch
      %46 = sbr.rel (0) target = $region29
    $region28: #{model_classifier_forward.1} parent=1 // pred_region
      %47 = dma.done [#allocation3], 1024
    $region29: #{model_classifier_forward.1} parent=1 // pred_fallthru
      _
    // Predicated region
    $region30: #{model_classifier_forward.1} parent=1 // pred_check
      _
    $region31: #{model_classifier_forward.1} parent=1 // pred_check_branch
      %49 = sbr.rel (0) target = $region33
    $region32: #{model_classifier_forward.1} parent=1 // pred_region
      %50 = dma.done [#allocation5], 1024
    $region33: #{model_classifier_forward.1} parent=1 // pred_fallthru
      _
    %v52 = vld [vmem:[%s1] sm:$0xff]
    %v53 = vmul.f32 %v52, 0.125
    %v54 = vlaneseq
    %v55 = vand.u32 %v54, 127
    %v56 = vld [vmem:[%s0] sm:$0xff]
    %v57 = vlaneseq
    %v58 = vshrl.u32 %v57, 7
    %v59 = vsub.s32 0, %v58
    %v60 = vrot.slane %v56, %v59
    %62 = vbcast.lane.b32.xlu0 %v60, 256
    %v63 = vpop.permute.xlu0 %62
    %v64 = vlaneseq
    %v65 = vshrl.u32 %v64, 7
    %v66 = vsub.s32 1, %v65
    %v67 = vrot.slane %v56, %v66
    %69 = vbcast.lane.b32.xlu0 %v67, 256
    %v70 = vpop.permute.xlu0 %69
    %v71 = vlaneseq
    %v72 = vshrl.u32 %v71, 7
    %v73 = vsub.s32 2, %v72
    %v74 = vrot.slane %v56, %v73
    %76 = vbcast.lane.b32.xlu0 %v74, 256
    %v77 = vpop.permute.xlu0 %76
    %v78 = vlaneseq
    %v79 = vshrl.u32 %v78, 7
    %v80 = vsub.s32 3, %v79
    %v81 = vrot.slane %v56, %v80
    %83 = vbcast.lane.b32.xlu0 %v81, 256
    %v84 = vpop.permute.xlu0 %83
    %v85 = vlaneseq
    %v86 = vshrl.u32 %v85, 7
    %v87 = vsub.s32 4, %v86
    %v88 = vrot.slane %v56, %v87
    %90 = vbcast.lane.b32.xlu0 %v88, 256
    %v91 = vpop.permute.xlu0 %90
    %v92 = vlaneseq
    %v93 = vshrl.u32 %v92, 7
    %v94 = vsub.s32 5, %v93
    %v95 = vrot.slane %v56, %v94
    %97 = vbcast.lane.b32.xlu0 %v95, 256
    %v98 = vpop.permute.xlu0 %97
    %v99 = vlaneseq
    %v100 = vshrl.u32 %v99, 7
    %v101 = vsub.s32 6, %v100
    %v102 = vrot.slane %v56, %v101
    %104 = vbcast.lane.b32.xlu0 %v102, 256
    %v105 = vpop.permute.xlu0 %104
    %v106 = vlaneseq
    %v107 = vshrl.u32 %v106, 7
    %v108 = vsub.s32 7, %v107
    %v109 = vrot.slane %v56, %v108
    %111 = vbcast.lane.b32.xlu0 %v109, 256
    %v112 = vpop.permute.xlu0 %111
    %vm113 = vcmp.eq.s32.totalorder %v63, %v55
    %vm114 = vcmp.eq.s32.totalorder %v70, %v55
    %vm115 = vcmp.eq.s32.totalorder %v77, %v55
    %vm116 = vcmp.eq.s32.totalorder %v84, %v55
    %vm117 = vcmp.eq.s32.totalorder %v91, %v55
    %vm118 = vcmp.eq.s32.totalorder %v98, %v55
    %vm119 = vcmp.eq.s32.totalorder %v105, %v55
    %vm120 = vcmp.eq.s32.totalorder %v112, %v55
    %v121 = vlaneseq
    %v122 = vshrl.u32 %v121, 7
    %v123 = vsub.s32 0, %v122
    %v124 = vrot.slane %v53, %v123
    %126 = vbcast.lane.b32.xlu0 %v124, 256
    %v127 = vpop.permute.xlu0 %126
    %v128 = vlaneseq
    %v129 = vshrl.u32 %v128, 7
    %v130 = vsub.s32 1, %v129
    %v131 = vrot.slane %v53, %v130
    %133 = vbcast.lane.b32.xlu0 %v131, 256
    %v134 = vpop.permute.xlu0 %133
    %v135 = vlaneseq
    %v136 = vshrl.u32 %v135, 7
    %v137 = vsub.s32 2, %v136
    %v138 = vrot.slane %v53, %v137
    %140 = vbcast.lane.b32.xlu0 %v138, 256
    %v141 = vpop.permute.xlu0 %140
    %v142 = vlaneseq
    %v143 = vshrl.u32 %v142, 7
    %v144 = vsub.s32 3, %v143
    %v145 = vrot.slane %v53, %v144
    %147 = vbcast.lane.b32.xlu0 %v145, 256
    %v148 = vpop.permute.xlu0 %147
    %v149 = vlaneseq
    %v150 = vshrl.u32 %v149, 7
    %v151 = vsub.s32 4, %v150
    %v152 = vrot.slane %v53, %v151
    %154 = vbcast.lane.b32.xlu0 %v152, 256
    %v155 = vpop.permute.xlu0 %154
    %v156 = vlaneseq
    %v157 = vshrl.u32 %v156, 7
    %v158 = vsub.s32 5, %v157
    %v159 = vrot.slane %v53, %v158
    %161 = vbcast.lane.b32.xlu0 %v159, 256
    %v162 = vpop.permute.xlu0 %161
    %v163 = vlaneseq
    %v164 = vshrl.u32 %v163, 7
    %v165 = vsub.s32 6, %v164
    %v166 = vrot.slane %v53, %v165
    %168 = vbcast.lane.b32.xlu0 %v166, 256
    %v169 = vpop.permute.xlu0 %168
    %v170 = vlaneseq
    %v171 = vshrl.u32 %v170, 7
    %v172 = vsub.s32 7, %v171
    %v173 = vrot.slane %v53, %v172
    %175 = vbcast.lane.b32.xlu0 %v173, 256
    %v176 = vpop.permute.xlu0 %175
    %v177 = vsel %vm113, %v127, 0.0
    %v178 = vsel %vm114, %v134, 0.0
    %v179 = vsel %vm115, %v141, 0.0
    %v180 = vsel %vm116, %v148, 0.0
    %v181 = vsel %vm117, %v155, 0.0
    %v182 = vsel %vm118, %v162, 0.0
    %v183 = vsel %vm119, %v169, 0.0
    %v184 = vsel %vm120, %v176, 0.0
    %v185 = vrot.slane %v177, 4
    %v186 = vadd.f32 %v177, %v185
    %v187 = vrot.slane %v186, 2
    %v188 = vadd.f32 %v186, %v187
    %v189 = vrot.slane %v188, 1
    %v190 = vadd.f32 %v188, %v189
    %v191 = vrot.slane %v178, 4
    %v192 = vadd.f32 %v178, %v191
    %v193 = vrot.slane %v192, 2
    %v194 = vadd.f32 %v192, %v193
    %v195 = vrot.slane %v194, 1
    %v196 = vadd.f32 %v194, %v195
    %v197 = vrot.slane %v179, 4
    %v198 = vadd.f32 %v179, %v197
    %v199 = vrot.slane %v198, 2
    %v200 = vadd.f32 %v198, %v199
    %v201 = vrot.slane %v200, 1
    %v202 = vadd.f32 %v200, %v201
    %v203 = vrot.slane %v180, 4
    %v204 = vadd.f32 %v180, %v203
    %v205 = vrot.slane %v204, 2
    %v206 = vadd.f32 %v204, %v205
    %v207 = vrot.slane %v206, 1
    %v208 = vadd.f32 %v206, %v207
    %v209 = vrot.slane %v181, 4
    %v210 = vadd.f32 %v181, %v209
    %v211 = vrot.slane %v210, 2
    %v212 = vadd.f32 %v210, %v211
    %v213 = vrot.slane %v212, 1
    %v214 = vadd.f32 %v212, %v213
    %v215 = vrot.slane %v182, 4
    %v216 = vadd.f32 %v182, %v215
    %v217 = vrot.slane %v216, 2
    %v218 = vadd.f32 %v216, %v217
    %v219 = vrot.slane %v218, 1
    %v220 = vadd.f32 %v218, %v219
    %v221 = vrot.slane %v183, 4
    %v222 = vadd.f32 %v183, %v221
    %v223 = vrot.slane %v222, 2
    %v224 = vadd.f32 %v222, %v223
    %v225 = vrot.slane %v224, 1
    %v226 = vadd.f32 %v224, %v225
    %v227 = vrot.slane %v184, 4
    %v228 = vadd.f32 %v184, %v227
    %v229 = vrot.slane %v228, 2
    %v230 = vadd.f32 %v228, %v229
    %v231 = vrot.slane %v230, 1
    %v232 = vadd.f32 %v230, %v231
    %v233 = vpack.c.bf16 %v190, %v190
    %v234 = vpack.c.bf16 %v196, %v196
    %v235 = vpack.c.bf16 %v202, %v202
    %v236 = vpack.c.bf16 %v208, %v208
    %v237 = vpack.c.bf16 %v214, %v214
    %v238 = vpack.c.bf16 %v220, %v220
    %v239 = vpack.c.bf16 %v226, %v226
    %v240 = vpack.c.bf16 %v232, %v232
    %v241 = vld [vmem:[#allocation2] sm:$0xf]
    %v242 = vld [vmem:[#allocation2 + $0x4] sm:$0xf]
    %v243 = vld [vmem:[#allocation2 + $0x8] sm:$0xf]
    %v244 = vld [vmem:[#allocation2 + $0xc] sm:$0xf]
    %v245 = vld [vmem:[#allocation2 + $0x10] sm:$0xf]
    %v246 = vld [vmem:[#allocation2 + $0x14] sm:$0xf]
    %v247 = vld [vmem:[#allocation2 + $0x18] sm:$0xf]
    %v248 = vld [vmem:[#allocation2 + $0x1c] sm:$0xf]
    %v249 = vld [vmem:[#allocation2 + $0x20] sm:$0xf]
    %v250 = vld [vmem:[#allocation2 + $0x24] sm:$0xf]
    %v251 = vld [vmem:[#allocation2 + $0x28] sm:$0xf]
    %v252 = vld [vmem:[#allocation2 + $0x2c] sm:$0xf]
    %v253 = vld [vmem:[#allocation2 + $0x30] sm:$0xf]
    %v254 = vld [vmem:[#allocation2 + $0x34] sm:$0xf]
    %v255 = vld [vmem:[#allocation2 + $0x38] sm:$0xf]
    %v256 = vld [vmem:[#allocation2 + $0x3c] sm:$0xf]
    %v257 = vld [vmem:[%s3] sm:$0x1]
    %v259 = vlaneseq
    %v260 = vshrl.u32 %v259, 7
    %v261 = vsub.s32 0, %v260
    %v262 = vrot.slane %v257, %v261
    %v272 = vunpack.c.l.b16 %v233
    %v273 = vunpack.c.l.b16 %v234
    %v274 = vunpack.c.l.b16 %v235
    %v275 = vunpack.c.l.b16 %v236
    %v276 = vunpack.c.l.b16 %v237
    %v277 = vunpack.c.l.b16 %v238
    %v278 = vunpack.c.l.b16 %v239
    %v279 = vunpack.c.l.b16 %v240
    %vm280 = vcmask 1041409
    %v281 = vsel %vm280, %v273, %v272
    %vm282 = vcmask 1042434
    %v283 = vsel %vm282, %v274, %v281
    %vm284 = vcmask 1043459
    %v285 = vsel %vm284, %v275, %v283
    %vm286 = vcmask 1044484
    %v287 = vsel %vm286, %v276, %v285
    %vm288 = vcmask 1045509
    %v289 = vsel %vm288, %v277, %v287
    %vm290 = vcmask 1046534
    %v291 = vsel %vm290, %v278, %v289
    %vm292 = vcmask 1047559
    %v293 = vsel %vm292, %v279, %v291
    %v294 = vpack.c.b16 %v293, %v293
    %v312 = vunpack.c.l.b16 %v241
    %v313 = vunpack.c.l.b16 %v242
    %v314 = vunpack.c.l.b16 %v243
    %v315 = vunpack.c.l.b16 %v244
    %v316 = vunpack.c.l.b16 %v245
    %v317 = vunpack.c.l.b16 %v246
    %v318 = vunpack.c.l.b16 %v247
    %v319 = vunpack.c.l.b16 %v248
    %v320 = vunpack.c.l.b16 %v249
    %v321 = vunpack.c.l.b16 %v250
    %v322 = vunpack.c.l.b16 %v251
    %v323 = vunpack.c.l.b16 %v252
    %v324 = vunpack.c.l.b16 %v253
    %v325 = vunpack.c.l.b16 %v254
    %v326 = vunpack.c.l.b16 %v255
    %v327 = vunpack.c.l.b16 %v256
    %v328 = vpack.c.b16 %v313, %v312
    %v329 = vpack.c.b16 %v315, %v314
    %v330 = vpack.c.b16 %v317, %v316
    %v331 = vpack.c.b16 %v319, %v318
    %v332 = vpack.c.b16 %v321, %v320
    %v333 = vpack.c.b16 %v323, %v322
    %v334 = vpack.c.b16 %v325, %v324
    %v335 = vpack.c.b16 %v327, %v326
    %344 = vmatprep.subr.bf16.mxu0 0
    %345 = vmatpush1.bf16.msra.mxu0 %v328
    %346 = vmatprep.subr.bf16.mxu0 0
    %347 = vmatpush1.bf16.msra.mxu0 %v329
    %348 = vmatprep.subr.bf16.mxu0 0
    %349 = vmatpush1.bf16.msra.mxu0 %v330
    %350 = vmatprep.subr.bf16.mxu0 0
    %351 = vmatpush1.bf16.msra.mxu0 %v331
    %352 = vmatprep.subr.bf16.mxu0 0
    %353 = vmatpush1.bf16.msra.mxu0 %v332
    %354 = vmatprep.subr.bf16.mxu0 0
    %355 = vmatpush1.bf16.msra.mxu0 %v333
    %356 = vmatprep.subr.bf16.mxu0 0
    %357 = vmatpush1.bf16.msra.mxu0 %v334
    %358 = vmatprep.subr.bf16.mxu0 0
    %359 = vmatpush1.bf16.msra.mxu0 %v335
    %360 = vmatprep.subr.bf16.mxu0 0
    %361 = vmatpush1.bf16.msra.mxu0 0
    %362 = vmatprep.subr.bf16.mxu0 0
    %363 = vmatpush1.bf16.msra.mxu0 0
    %364 = vmatprep.subr.bf16.mxu0 0
    %365 = vmatpush1.bf16.msra.mxu0 0
    %366 = vmatprep.subr.bf16.mxu0 0
    %367 = vmatpush1.bf16.msra.mxu0 0
    %368 = vmatprep.subr.bf16.mxu0 0
    %369 = vmatpush1.bf16.msra.mxu0 0
    %370 = vmatprep.subr.bf16.mxu0 0
    %371 = vmatpush1.bf16.msra.mxu0 0
    %372 = vmatprep.subr.bf16.mxu0 0
    %373 = vmatpush1.bf16.msra.mxu0 0
    %374 = vmatprep.subr.bf16.mxu0 0
    %375 = vmatpush1.bf16.msra.mxu0 0
    %376 = vmatprep.mubr.bf16.mxu0 0
    %377 = vmatmul.mubr.bf16.gmra.mrb[0].mxu0 %v294
    %v378 = vpop.f32.mrb[0].mxu0
    %v379 = vadd.f32 %v262, %v378
    %v380 = vpop.f32.mrb[0].mxu0
    %v381 = vpop.f32.mrb[0].mxu0
    %v382 = vpop.f32.mrb[0].mxu0
    %383 = vdwg.mxu0
    %v384 = vmax.f32 %v379, 0.0
    %v385 = vpack.c.bf16 %v384, %v384
    %v386 = vld [vmem:[#allocation4] sm:$0xf]
    %v387 = vld [vmem:[#allocation4 + $0x4] sm:$0xf]
    %v388 = vld [vmem:[#allocation4 + $0x8] sm:$0xf]
    %v389 = vld [vmem:[#allocation4 + $0xc] sm:$0xf]
    %v390 = vld [vmem:[#allocation4 + $0x10] sm:$0xf]
    %v391 = vld [vmem:[#allocation4 + $0x14] sm:$0xf]
    %v392 = vld [vmem:[#allocation4 + $0x18] sm:$0xf]
    %v393 = vld [vmem:[#allocation4 + $0x1c] sm:$0xf]
    %v394 = vld [vmem:[#allocation4 + $0x20] sm:$0xf]
    %v395 = vld [vmem:[#allocation4 + $0x24] sm:$0xf]
    %v396 = vld [vmem:[#allocation4 + $0x28] sm:$0xf]
    %v397 = vld [vmem:[#allocation4 + $0x2c] sm:$0xf]
    %v398 = vld [vmem:[#allocation4 + $0x30] sm:$0xf]
    %v399 = vld [vmem:[#allocation4 + $0x34] sm:$0xf]
    %v400 = vld [vmem:[#allocation4 + $0x38] sm:$0xf]
    %v401 = vld [vmem:[#allocation4 + $0x3c] sm:$0xf]
    %v402 = vld [vmem:[%s5] sm:$0x1]
    %v404 = vlaneseq
    %v405 = vshrl.u32 %v404, 7
    %v406 = vsub.s32 0, %v405
    %v407 = vrot.slane %v402, %v406
    %v425 = vunpack.c.l.b16 %v386
    %v426 = vunpack.c.l.b16 %v387
    %v427 = vunpack.c.l.b16 %v388
    %v428 = vunpack.c.l.b16 %v389
    %v429 = vunpack.c.l.b16 %v390
    %v430 = vunpack.c.l.b16 %v391
    %v431 = vunpack.c.l.b16 %v392
    %v432 = vunpack.c.l.b16 %v393
    %v433 = vunpack.c.l.b16 %v394
    %v434 = vunpack.c.l.b16 %v395
    %v435 = vunpack.c.l.b16 %v396
    %v436 = vunpack.c.l.b16 %v397
    %v437 = vunpack.c.l.b16 %v398
    %v438 = vunpack.c.l.b16 %v399
    %v439 = vunpack.c.l.b16 %v400
    %v440 = vunpack.c.l.b16 %v401
    %v441 = vpack.c.b16 %v426, %v425
    %v442 = vpack.c.b16 %v428, %v427
    %v443 = vpack.c.b16 %v430, %v429
    %v444 = vpack.c.b16 %v432, %v431
    %v445 = vpack.c.b16 %v434, %v433
    %v446 = vpack.c.b16 %v436, %v435
    %v447 = vpack.c.b16 %v438, %v437
    %v448 = vpack.c.b16 %v440, %v439
    %457 = vmatprep.subr.bf16.mxu0 0
    %458 = vmatpush1.bf16.msra.mxu0 %v441
    %459 = vmatprep.subr.bf16.mxu0 0
    %460 = vmatpush1.bf16.msra.mxu0 %v442
    %461 = vmatprep.subr.bf16.mxu0 0
    %462 = vmatpush1.bf16.msra.mxu0 %v443
    %463 = vmatprep.subr.bf16.mxu0 0
    %464 = vmatpush1.bf16.msra.mxu0 %v444
    %465 = vmatprep.subr.bf16.mxu0 0
    %466 = vmatpush1.bf16.msra.mxu0 %v445
    %467 = vmatprep.subr.bf16.mxu0 0
    %468 = vmatpush1.bf16.msra.mxu0 %v446
    %469 = vmatprep.subr.bf16.mxu0 0
    %470 = vmatpush1.bf16.msra.mxu0 %v447
    %471 = vmatprep.subr.bf16.mxu0 0
    %472 = vmatpush1.bf16.msra.mxu0 %v448
    %473 = vmatprep.subr.bf16.mxu0 0
    %474 = vmatpush1.bf16.msra.mxu0 0
    %475 = vmatprep.subr.bf16.mxu0 0
    %476 = vmatpush1.bf16.msra.mxu0 0
    %477 = vmatprep.subr.bf16.mxu0 0
    %478 = vmatpush1.bf16.msra.mxu0 0
    %479 = vmatprep.subr.bf16.mxu0 0
    %480 = vmatpush1.bf16.msra.mxu0 0
    %481 = vmatprep.subr.bf16.mxu0 0
    %482 = vmatpush1.bf16.msra.mxu0 0
    %483 = vmatprep.subr.bf16.mxu0 0
    %484 = vmatpush1.bf16.msra.mxu0 0
    %485 = vmatprep.subr.bf16.mxu0 0
    %486 = vmatpush1.bf16.msra.mxu0 0
    %487 = vmatprep.subr.bf16.mxu0 0
    %488 = vmatpush1.bf16.msra.mxu0 0
    %489 = vmatprep.mubr.bf16.mxu0 0
    %490 = vmatmul.mubr.bf16.gmra.mrb[0].mxu0 %v385
    %v491 = vpop.f32.mrb[0].mxu0
    %v492 = vadd.f32 %v407, %v491
    %v493 = vpop.f32.mrb[0].mxu0
    %v494 = vpop.f32.mrb[0].mxu0
    %v495 = vpop.f32.mrb[0].mxu0
    %496 = vdwg.mxu0
    %497 = vst [vmem:[%s6] sm:$0xff] %v492
    // Predicated region
    $region34: #{model_classifier_forward.1} parent=1 // pred_check
      _
    $region35: #{model_classifier_forward.1} parent=1 // pred_check_branch
      %499 = sbr.rel (0) target = $region37
    $region36: #{model_classifier_forward.1} parent=1 // pred_region
      _
    $region37: #{model_classifier_forward.1} parent=1 // pred_fallthru
      _
    // Predicated region
    $region38: #{model_classifier_forward.1} parent=1 // pred_check
      _
    $region39: #{model_classifier_forward.1} parent=1 // pred_check_branch
      %501 = sbr.rel (0) target = $region41
    $region40: #{model_classifier_forward.1} parent=1 // pred_region
      _
    $region41: #{model_classifier_forward.1} parent=1 // pred_fallthru
      _
    %502 = vsyncpa [#allocation3], 1
    %503 = vsyncpa [#allocation5], 1

</llo_original>
